<compile_context>
chip_gen: v5e
topology: v5e:2x2
jax: 0.10.0
libtpu: 0.0.40
codegen_flags: <defaults>
</compile_context>

<pallas_src>
import jax
import jax.numpy as jnp
import numpy as np
from jax.experimental import pallas as pl
from jax.experimental.pallas import tpu as pltpu


# ----------------------------------------------------------------------------
# VMEM budgeting (per TPU generation, queried once at trace time)
# ----------------------------------------------------------------------------
_MiB = 1024 * 1024
_VMEM_CONFIG_CACHE = None


def _vmem_config():
    """Returns (vmem_limit_bytes, per_block_budget_bytes) for this chip."""
    global _VMEM_CONFIG_CACHE
    if _VMEM_CONFIG_CACHE is not None:
        return _VMEM_CONFIG_CACHE
    physical = 128 * _MiB                          # v5e / v6e physical VMEM
    try:
        info = pltpu.get_tpu_info()
        cap = getattr(info, "vmem_capacity_bytes", None)
        if cap:
            physical = int(cap)
    except Exception:                              # not on TPU / older runtime
        pass
    if physical <= 64 * _MiB:
        # v7x-class (64 MiB/TC): cap well below physical so double-buffering
        # and compiler scratch stay intact at the higher HBM rate.
        vmem_limit = min((physical * 3) // 4, 48 * _MiB)
    else:
        # v5e / v6e: 128 MiB physical, but the default scoped limit is only
        # 16 / 32 MiB -- raise it explicitly.
        vmem_limit = 64 * _MiB
    # ~4 live blocks per grid step (double-buffered input + output) plus
    # gate blocks / compiler scratch headroom.
    block_budget = vmem_limit // 6
    _VMEM_CONFIG_CACHE = (vmem_limit, block_budget)
    return _VMEM_CONFIG_CACHE


# ----------------------------------------------------------------------------
# Scale path: out = x * gate  (mem-bound hot loop, 2-D lane-dense tiling)
# ----------------------------------------------------------------------------
_MAX_ROW_BLOCK = 512            # rows (N*C) per block; multiple of 8
_MIN_PALLAS_LANES = 128         # below one full lane -> masked stores -> XLA
_MIN_PALLAS_BYTES = 48 * 1024   # below this the pallas_call fixed overhead
                                # dominates; raise toward ~1 MiB in a model


def _scale_kernel(x_ref, g_ref, o_ref):
    """out = x * gate, gate broadcast along the lane (spatial) axis."""
    o_ref[...] = (x_ref[...] * g_ref[...]).astype(o_ref.dtype)


def _choose_tiles(rows, lanes, itemsize, block_budget_bytes):
    """Row / lane tile sizes for the 2-D scale kernel."""
    rb = rows if rows <= _MAX_ROW_BLOCK else _MAX_ROW_BLOCK
    # Largest lane-aligned tile whose double-buffered in+out blocks fit budget.
    # (128-lane floor: with rb <= 512 and f32 this is <= 256 KiB, always safe
    # against the multi-MiB budgets produced by _vmem_config.)
    t_max = block_budget_bytes // max(1, rb * itemsize)
    t_max = max(128, (t_max // 128) * 128)
    if lanes <= t_max:
        return rb, lanes                           # full extent: always legal
    t = t_max
    # Prefer an evenly dividing lane-aligned tile only if it stays within 2x of
    # the budget tile; otherwise keep t_max and let Pallas mask the ragged tail
    # (one partially-masked store per row of the grid beats 2-8x lost BW).
    for cand in range(t_max, t_max // 2 - 1, -128):
        if cand >= 128 and lanes % cand == 0:
            t = cand
            break
    return rb, t


def scale_2d(x2d, g2d, *, block_budget_bytes=None, vmem_limit_bytes=None):
    """x2d: (R, HW) * g2d: (R, 1) -> (R, HW), tiled over rows and lane chunks."""
    rows, lanes = x2d.shape
    limit, budget = _vmem_config()
    vmem_limit_bytes = vmem_limit_bytes or limit
    block_budget_bytes = block_budget_bytes or budget
    itemsize = jnp.dtype(x2d.dtype).itemsize
    rb, t = _choose_tiles(rows, lanes, itemsize, block_budget_bytes)
    grid = (pl.cdiv(rows, rb), pl.cdiv(lanes, t))
    return pl.pallas_call(
        _scale_kernel,
        out_shape=jax.ShapeDtypeStruct((rows, lanes), x2d.dtype),
        grid=grid,
        in_specs=[
            pl.BlockSpec((rb, t), lambda r, s: (r, s)),
            pl.BlockSpec((rb, 1), lambda r, s: (r, 0)),
        ],
        out_specs=pl.BlockSpec((rb, t), lambda r, s: (r, s)),
        compiler_params=pltpu.CompilerParams(
            dimension_semantics=("parallel", "parallel"),
            vmem_limit_bytes=vmem_limit_bytes),
    )(x2d, g2d)


# ----------------------------------------------------------------------------
# Gate path: pooled attention -> per-branch sigmoid gates
# ----------------------------------------------------------------------------
def _make_gate_kernel(channels):
    bounds, start = [], 0
    for c in channels:
        bounds.append((start, start + c))
        start += c

    def kernel(y_ref, wq_ref, wv_ref, wout_ref, bout_ref, *gate_refs):
        # One batch element per grid step (the batch axis is "parallel").
        y = y_ref[...]                                      # (C, HW) f32
        # q logits: channel-weighted reduction of y -> (1, HW)
        q_logits = jnp.sum(y * wq_ref[...], axis=0, keepdims=True)
        # softmax over spatial positions (lanes)
        m = jnp.max(q_logits, axis=-1, keepdims=True)
        e = jnp.exp(q_logits - m)                           # EUP
        s = jnp.sum(e, axis=-1, keepdims=True)
        q = e * pl.reciprocal(s, approx=True)               # EUP reciprocal
        # Reassociated reduction -- never materialize the (internal, HW) tensor:
        #   r[c] = sum_s y[c, s] * q[s];  z = wv @ r (== (wv @ y) @ q)
        r = jnp.sum(y * q, axis=-1, keepdims=True)          # (C, 1)
        z = jnp.dot(wv_ref[...], r,
                    preferred_element_type=jnp.float32)     # (I, 1)
        g = jnp.dot(wout_ref[...], z,
                    preferred_element_type=jnp.float32)     # (C, 1)
        gate = jax.nn.sigmoid(g + bout_ref[...])            # (C, 1)
        # Emit per-branch gates directly (no wrapper-side slicing afterwards).
        for (lo, hi), gref in zip(bounds, gate_refs):
            gref[...] = gate[lo:hi, :]

    return kernel


def attention_gates(y_flat, wq_col, wv, wout, bout, channels):
    """Per-branch sigmoid gates; one grid step per batch element."""
    n, total_c, hw = y_flat.shape
    internal_c = wv.shape[0]
    kernel = _make_gate_kernel(channels)
    out_shape = tuple(
        jax.ShapeDtypeStruct((n, c, 1), jnp.float32) for c in channels)
    out_specs = tuple(
        pl.BlockSpec((None, c, 1), lambda b: (b, 0, 0)) for c in channels)
    return pl.pallas_call(
        kernel,
        out_shape=out_shape,
        grid=(n,),
        in_specs=[
            pl.BlockSpec((None, total_c, hw), lambda b: (b, 0, 0)),
            pl.BlockSpec((total_c, 1), lambda b: (0, 0)),
            pl.BlockSpec((internal_c, total_c), lambda b: (0, 0)),
            pl.BlockSpec((total_c, internal_c), lambda b: (0, 0)),
            pl.BlockSpec((total_c, 1), lambda b: (0, 0)),
        ],
        out_specs=out_specs,
        compiler_params=pltpu.CompilerParams(
            dimension_semantics=("parallel",)),
    )(y_flat, wq_col, wv, wout, bout)


# ----------------------------------------------------------------------------
# Glue + full forward
# ----------------------------------------------------------------------------
def adaptive_avg_pool2d(x, out_hw):
    """Matches F.adaptive_avg_pool2d for integer downscale ratios."""
    # TODO(synk): non-integer adaptive-pool ratios (uneven PyTorch bins) not supported.
    n, c, h, w = x.shape
    oh, ow = out_hw
    assert h % oh == 0 and w % ow == 0, "integer pooling ratios only"
    return x.reshape(n, c, oh, h // oh, ow, w // ow).mean(axis=(3, 5))


def cross_resolution_weighting_v2(xs, params, channels):
    """Pallas-backed forward of CrossResolutionWeightingV2."""
    wv, wq, wout, bout = params
    total_c = sum(channels)
    min_h, min_w = xs[-1].shape[-2:]

    # TODO(synk): pool + concat could be fused into the gate kernel via manual
    # DMA; kept in XLA because the pooled tensors are tiny (min resolution).
    pooled = [adaptive_avg_pool2d(s, (min_h, min_w)) for s in xs[:-1]] + [xs[-1]]
    y = jnp.concatenate(pooled, axis=1)                     # (N, total_C, h, w)
    n, _, h, w = y.shape
    y_flat = y.reshape(n, total_c, h * w)

    wq_col = wq.reshape(total_c, 1)                         # (total_C, 1)
    gates = attention_gates(y_flat, wq_col, wv, wout, bout, channels)

    outs = []
    for x_i, g_i in zip(xs, gates):                         # g_i: (N, c, 1)
        ni, ci, hi, wi = x_i.shape
        hw = hi * wi
        nbytes = x_i.size * x_i.dtype.itemsize
        if hw < _MIN_PALLAS_LANES or nbytes < _MIN_PALLAS_BYTES:
            # Too small to amortize a pallas_call; XLA fuses this multiply and
            # avoids masked sub-128-lane stores.
            out_i = (x_i * g_i[..., None]).astype(x_i.dtype)
        else:
            out2d = scale_2d(x_i.reshape(ni * ci, hw), g_i.reshape(ni * ci, 1))
            out_i = out2d.reshape(ni, ci, hi, wi)
        outs.append(out_i)
    return outs


# ----------------------------------------------------------------------------
# Pure-JAX reference (mirrors the PyTorch forward) for verification
# ----------------------------------------------------------------------------
def reference_forward(xs, params, channels):
    wv, wq, wout, bout = params
    min_h, min_w = xs[-1].shape[-2:]
    pooled = [adaptive_avg_pool2d(s, (min_h, min_w)) for s in xs[:-1]] + [xs[-1]]
    y = jnp.concatenate(pooled, axis=1)
    n, total_c, h, w = y.shape
    yf = y.reshape(n, total_c, h * w)
    v = jnp.einsum("ic,ncs->nis", wv, yf)                   # (N, internal, HW)
    q = jax.nn.softmax(jnp.einsum("oc,ncs->nos", wq, yf), axis=-1)
    z = jnp.einsum("nis,nos->ni", v, q)                     # (N, internal)
    g = jax.nn.sigmoid(z @ wout.T + bout[:, 0])             # (N, total_C)
    outs, start = [], 0
    for x_i, c in zip(xs, channels):
        gc = g[:, start:start + c].reshape(-1, c, 1, 1)
        outs.append(x_i * gc)
        start += c
    return outs


# ----------------------------------------------------------------------------
if __name__ == "__main__":
    # 3 resolution branches, integer pooling ratios down to 14x14.
    channels = [4, 8, 16]
    ratio = 4
    total_c = sum(channels)               # 28
    internal_c = total_c // ratio         # 7
    batch = 2
    spatials = [56, 28, 14]

    key = jax.random.PRNGKey(0)
    k_in, k_wv, k_wq, k_wo, k_bo, k_g = jax.random.split(key, 6)

    in_keys = jax.random.split(k_in, len(channels))
    xs = [jax.random.normal(k, (batch, c, s, s), dtype=jnp.float32)
          for k, c, s in zip(in_keys, channels, spatials)]

    # 1x1 conv weights squeezed to 2D, PyTorch layout.
    wv = 0.1 * jax.random.normal(k_wv, (internal_c, total_c), dtype=jnp.float32)
    wq = 0.1 * jax.random.normal(k_wq, (1, total_c), dtype=jnp.float32)
    wout = 0.1 * jax.random.normal(k_wo, (total_c, internal_c), dtype=jnp.float32)
    bout = 0.1 * jax.random.normal(k_bo, (total_c, 1), dtype=jnp.float32)
    params = (wv, wq, wout, bout)
    # TODO(synk): out_conv norm_cfg (BatchNorm) omitted; synthetic config uses
    # norm_cfg=None so ConvModule == conv(bias=True) + Sigmoid, matched exactly.

    outs = cross_resolution_weighting_v2(xs, params, channels)
    outs = [jax.block_until_ready(o) for o in outs]

    refs = reference_forward(xs, params, channels)
    for o, r in zip(outs, refs):
        # Tolerance accounts for the approximate EUP reciprocal used in the
        # gate softmax (gate-level error ~1e-4) and the reassociated reduction.
        np.testing.assert_allclose(np.asarray(o), np.asarray(r),
                                   rtol=1e-3, atol=1e-3)

    # Extra coverage: force lane tiling with a ragged (masked) last tile by
    # shrinking the per-block budget (HW = 3136 has no 128-aligned divisor, so
    # the kernel takes the big tile + masked tail path).
    x0 = xs[0]
    n0, c0, h0, w0 = x0.shape
    x0_2d = x0.reshape(n0 * c0, h0 * w0)
    g_test = jax.random.uniform(k_g, (n0 * c0, 1), dtype=jnp.float32)
    ragged = scale_2d(x0_2d, g_test, block_budget_bytes=64 * 1024)
    jax.block_until_ready(ragged)
    np.testing.assert_allclose(np.asarray(ragged), np.asarray(x0_2d * g_test),
                               rtol=1e-6, atol=1e-6)

    print("KERNEL_OK")
</pallas_src>

<mosaic_0001>
module attributes {stable_mosaic.version = 11 : i64} {
  func.func @kernel(%arg0: i32, %arg1: memref<1x28x196xf32, #tpu.memory_space<vmem>>, %arg2: memref<28x1xf32, #tpu.memory_space<vmem>>, %arg3: memref<7x28xf32, #tpu.memory_space<vmem>>, %arg4: memref<28x7xf32, #tpu.memory_space<vmem>>, %arg5: memref<28x1xf32, #tpu.memory_space<vmem>>, %arg6: memref<1x4x1xf32, #tpu.memory_space<vmem>>, %arg7: memref<1x8x1xf32, #tpu.memory_space<vmem>>, %arg8: memref<1x16x1xf32, #tpu.memory_space<vmem>>) attributes {dimension_semantics = [#tpu.dimension_semantics<parallel>], iteration_bounds = array<i64: 2>, scalar_prefetch = 0 : i64, scratch_operands = 0 : i64, tpu.core_type = #tpu.core_type<tc>, window_params = [{transform_indices = @transform_0, window_bounds = array<i64: 1, 28, 196>}, {pipeline_mode = #tpu.pipeline_mode<synchronous>, transform_indices = @transform_1, window_bounds = array<i64: 28, 1>}, {pipeline_mode = #tpu.pipeline_mode<synchronous>, transform_indices = @transform_2, window_bounds = array<i64: 7, 28>}, {pipeline_mode = #tpu.pipeline_mode<synchronous>, transform_indices = @transform_3, window_bounds = array<i64: 28, 7>}, {pipeline_mode = #tpu.pipeline_mode<synchronous>, transform_indices = @transform_4, window_bounds = array<i64: 28, 1>}, {transform_indices = @transform_5, window_bounds = array<i64: 1, 4, 1>}, {transform_indices = @transform_6, window_bounds = array<i64: 1, 8, 1>}, {transform_indices = @transform_7, window_bounds = array<i64: 1, 16, 1>}]} {
    %c0 = arith.constant 0 : index
    %c0_0 = arith.constant 0 : index
    %c0_1 = arith.constant 0 : index
    %0 = vector.load %arg1[%c0, %c0_0, %c0_1] : memref<1x28x196xf32, #tpu.memory_space<vmem>>, vector<1x28x196xf32>
    %1 = vector.shape_cast %0 : vector<1x28x196xf32> to vector<28x196xf32>
    %c0_2 = arith.constant 0 : index
    %c0_3 = arith.constant 0 : index
    %2 = vector.load %arg2[%c0_2, %c0_3] : memref<28x1xf32, #tpu.memory_space<vmem>>, vector<28x1xf32>
    %3 = vector.broadcast %2 : vector<28x1xf32> to vector<28x196xf32>
    %4 = arith.mulf %1, %3 : vector<28x196xf32>
    %cst = arith.constant dense<0.000000e+00> : vector<196xf32>
    %5 = vector.multi_reduction <add>, %4, %cst [0] : vector<28x196xf32> to vector<196xf32>
    %6 = vector.shape_cast %5 : vector<196xf32> to vector<1x196xf32>
    %cst_4 = arith.constant dense<0xFF800000> : vector<1xf32>
    %7 = vector.multi_reduction <maximumf>, %6, %cst_4 [1] : vector<1x196xf32> to vector<1xf32>
    %8 = vector.shape_cast %7 : vector<1xf32> to vector<1x1xf32>
    %9 = vector.broadcast %8 : vector<1x1xf32> to vector<1x196xf32>
    %10 = arith.subf %6, %9 : vector<1x196xf32>
    %11 = math.exp %10 : vector<1x196xf32>
    %cst_5 = arith.constant dense<0.000000e+00> : vector<1xf32>
    %12 = vector.multi_reduction <add>, %11, %cst_5 [1] : vector<1x196xf32> to vector<1xf32>
    %13 = vector.shape_cast %12 : vector<1xf32> to vector<1x1xf32>
    %14 = tpu.reciprocal %13 {approx = true} : vector<1x1xf32> -> vector<1x1xf32>
    %15 = vector.broadcast %14 : vector<1x1xf32> to vector<1x196xf32>
    %16 = arith.mulf %11, %15 : vector<1x196xf32>
    %17 = vector.broadcast %16 : vector<1x196xf32> to vector<28x196xf32>
    %18 = arith.mulf %1, %17 : vector<28x196xf32>
    %cst_6 = arith.constant dense<0.000000e+00> : vector<28xf32>
    %19 = vector.multi_reduction <add>, %18, %cst_6 [1] : vector<28x196xf32> to vector<28xf32>
    %20 = vector.shape_cast %19 : vector<28xf32> to vector<28x1xf32>
    %c0_7 = arith.constant 0 : index
    %c0_8 = arith.constant 0 : index
    %21 = vector.load %arg3[%c0_7, %c0_8] : memref<7x28xf32, #tpu.memory_space<vmem>>, vector<7x28xf32>
    %cst_9 = arith.constant dense<0.000000e+00> : vector<7x1xf32>
    %22 = tpu.matmul %21, %20, %cst_9 {dimension_numbers = #tpu.dot_dimension_numbers<[1], [0], [0], [1], [0, 0, 1, 1], [], []>} : vector<7x28xf32>, vector<28x1xf32>, vector<7x1xf32> -> vector<7x1xf32>
    %c0_10 = arith.constant 0 : index
    %c0_11 = arith.constant 0 : index
    %23 = vector.load %arg4[%c0_10, %c0_11] : memref<28x7xf32, #tpu.memory_space<vmem>>, vector<28x7xf32>
    %cst_12 = arith.constant dense<0.000000e+00> : vector<28x1xf32>
    %24 = tpu.matmul %23, %22, %cst_12 {dimension_numbers = #tpu.dot_dimension_numbers<[1], [0], [0], [1], [0, 0, 1, 1], [], []>} : vector<28x7xf32>, vector<7x1xf32>, vector<28x1xf32> -> vector<28x1xf32>
    %c0_13 = arith.constant 0 : index
    %c0_14 = arith.constant 0 : index
    %25 = vector.load %arg5[%c0_13, %c0_14] : memref<28x1xf32, #tpu.memory_space<vmem>>, vector<28x1xf32>
    %26 = arith.addf %24, %25 : vector<28x1xf32>
    %27 = arith.negf %26 : vector<28x1xf32>
    %28 = math.exp %27 : vector<28x1xf32>
    %cst_15 = arith.constant 1.000000e+00 : f32
    %29 = vector.broadcast %cst_15 : f32 to vector<28x1xf32>
    %30 = arith.addf %29, %28 : vector<28x1xf32>
    %31 = arith.divf %29, %30 : vector<28x1xf32>
    %32 = vector.extract_strided_slice %31 {offsets = [0, 0], sizes = [4, 1], strides = [1, 1]} : vector<28x1xf32> to vector<4x1xf32>
    %c0_16 = arith.constant 0 : index
    %c0_17 = arith.constant 0 : index
    %c0_18 = arith.constant 0 : index
    %33 = vector.load %arg6[%c0_16, %c0_17, %c0_18] : memref<1x4x1xf32, #tpu.memory_space<vmem>>, vector<1x4x1xf32>
    %34 = vector.shape_cast %33 : vector<1x4x1xf32> to vector<4x1xf32>
    %35 = vector.shape_cast %32 : vector<4x1xf32> to vector<1x4x1xf32>
    tpu.vector_store %arg6[%c0_16, %c0_17, %c0_18], %35 {strides = array<i32>} : memref<1x4x1xf32, #tpu.memory_space<vmem>>, vector<1x4x1xf32>,
    %36 = vector.extract_strided_slice %31 {offsets = [4, 0], sizes = [8, 1], strides = [1, 1]} : vector<28x1xf32> to vector<8x1xf32>
    %c0_19 = arith.constant 0 : index
    %c0_20 = arith.constant 0 : index
    %c0_21 = arith.constant 0 : index
    %37 = vector.load %arg7[%c0_19, %c0_20, %c0_21] : memref<1x8x1xf32, #tpu.memory_space<vmem>>, vector<1x8x1xf32>
    %38 = vector.shape_cast %37 : vector<1x8x1xf32> to vector<8x1xf32>
    %39 = vector.shape_cast %36 : vector<8x1xf32> to vector<1x8x1xf32>
    tpu.vector_store %arg7[%c0_19, %c0_20, %c0_21], %39 {strides = array<i32>} : memref<1x8x1xf32, #tpu.memory_space<vmem>>, vector<1x8x1xf32>,
    %40 = vector.extract_strided_slice %31 {offsets = [12, 0], sizes = [16, 1], strides = [1, 1]} : vector<28x1xf32> to vector<16x1xf32>
    %c0_22 = arith.constant 0 : index
    %c0_23 = arith.constant 0 : index
    %c0_24 = arith.constant 0 : index
    %41 = vector.load %arg8[%c0_22, %c0_23, %c0_24] : memref<1x16x1xf32, #tpu.memory_space<vmem>>, vector<1x16x1xf32>
    %42 = vector.shape_cast %41 : vector<1x16x1xf32> to vector<16x1xf32>
    %43 = vector.shape_cast %40 : vector<16x1xf32> to vector<1x16x1xf32>
    tpu.vector_store %arg8[%c0_22, %c0_23, %c0_24], %43 {strides = array<i32>} : memref<1x16x1xf32, #tpu.memory_space<vmem>>, vector<1x16x1xf32>,
    return
  }
  func.func @transform_0(%arg0: i32) -> (i32, i32, i32) {
    %c0_i32 = arith.constant 0 : i32
    %c0_i32_0 = arith.constant 0 : i32
    %c0_i32_1 = arith.constant 0 : i32
    return %arg0, %c0_i32, %c0_i32_0 : i32, i32, i32
  }
  func.func @transform_1(%arg0: i32) -> (i32, i32) {
    %c0_i32 = arith.constant 0 : i32
    %c0_i32_0 = arith.constant 0 : i32
    %c0_i32_1 = arith.constant 0 : i32
    return %c0_i32, %c0_i32_0 : i32, i32
  }
  func.func @transform_2(%arg0: i32) -> (i32, i32) {
    %c0_i32 = arith.constant 0 : i32
    %c0_i32_0 = arith.constant 0 : i32
    %c0_i32_1 = arith.constant 0 : i32
    return %c0_i32, %c0_i32_0 : i32, i32
  }
  func.func @transform_3(%arg0: i32) -> (i32, i32) {
    %c0_i32 = arith.constant 0 : i32
    %c0_i32_0 = arith.constant 0 : i32
    %c0_i32_1 = arith.constant 0 : i32
    return %c0_i32, %c0_i32_0 : i32, i32
  }
  func.func @transform_4(%arg0: i32) -> (i32, i32) {
    %c0_i32 = arith.constant 0 : i32
    %c0_i32_0 = arith.constant 0 : i32
    %c0_i32_1 = arith.constant 0 : i32
    return %c0_i32, %c0_i32_0 : i32, i32
  }
  func.func @transform_5(%arg0: i32) -> (i32, i32, i32) {
    %c0_i32 = arith.constant 0 : i32
    %c0_i32_0 = arith.constant 0 : i32
    %c0_i32_1 = arith.constant 0 : i32
    return %arg0, %c0_i32, %c0_i32_0 : i32, i32, i32
  }
  func.func @transform_6(%arg0: i32) -> (i32, i32, i32) {
    %c0_i32 = arith.constant 0 : i32
    %c0_i32_0 = arith.constant 0 : i32
    %c0_i32_1 = arith.constant 0 : i32
    return %arg0, %c0_i32, %c0_i32_0 : i32, i32, i32
  }
  func.func @transform_7(%arg0: i32) -> (i32, i32, i32) {
    %c0_i32 = arith.constant 0 : i32
    %c0_i32_0 = arith.constant 0 : i32
    %c0_i32_1 = arith.constant 0 : i32
    return %arg0, %c0_i32, %c0_i32_0 : i32, i32, i32
  }
}

</mosaic_0001>

<llo_original>
// kernel: tpu_custom_call.1
$region0: #{tpu_custom_call.1}
  #allocation0 [shape = 'u32[]', space=smem, size = 0x4, offset = 0x4, fixed_abs, tag = 'smem constant byte address 0x4 - core index']
  #allocation1 [shape = 'u32[72,128]{1,0:T(1,128)}', space=vmem, size = 0x9000, scoped, tag = 'internal scratch']
  %s0 = inlined_call_operand.vmem [shape: f32[2,28,196], index: 0, kind: input, shape index: {}]
  %s1 = inlined_call_operand.vmem [shape: f32[28,1], index: 1, kind: input, shape index: {}]
  %s2 = inlined_call_operand.vmem [shape: f32[7,28], index: 2, kind: input, shape index: {}]
  %s3 = inlined_call_operand.vmem [shape: f32[28,7], index: 3, kind: input, shape index: {}]
  %s4 = inlined_call_operand.vmem [shape: f32[28,1], index: 4, kind: input, shape index: {}]
  %s5 = inlined_call_operand.vmem [shape: f32[2,4,1], index: 5, kind: output, shape index: {0}]
  %s6 = inlined_call_operand.vmem [shape: f32[2,8,1], index: 6, kind: output, shape index: {1}]
  %s7 = inlined_call_operand.vmem [shape: f32[2,16,1], index: 7, kind: output, shape index: {2}]
  %8 = xla_tuple %s5, %s6, %s7
  %s9 = sld [smem:[#allocation0]]
  $region69: #{tpu_custom_call.1} parent=0
    _
  %s11 = ssub.s32 1, %s9
  %s12 = scalar_select 0, %s11, %s9
  loop: start=0, step=1, limit=4
  $region2: #{tpu_custom_call.1} parent=0 // loop_pre_header
    _
  $region3: #{tpu_custom_call.1} parent=0 // loop_header
    %s14 = sphi 0, %s18
    %p15 = scmp.ge.s32.totalorder %s14, 4
    %s24 = sphi 0, %s26
    %s27 = sphi 0, %s24
    %s28 = sphi 0, %s27
    %s44 = sphi 0, %s28
    %s48 = sphi 0, %s48
    %s50 = sphi 0, %s48
    %s51 = sphi 0, %s50
    %s65 = sphi 0, %s51
    %s69 = sphi 0, %s69
    %s71 = sphi 0, %s69
    %s72 = sphi 0, %s71
    %s86 = sphi 0, %s72
    %s90 = sphi 0, %s90
    %s92 = sphi 0, %s90
    %s93 = sphi 0, %s92
    %s107 = sphi 0, %s93
    %s111 = sphi 0, %s111
    %s113 = sphi 0, %s111
    %s114 = sphi 0, %s113
    %s128 = sphi 0, %s114
    %s134 = sphi 0, %s136
    %s137 = sphi 0, %s134
    %s138 = sphi 0, %s137
    %s154 = sphi 0, %s138
    %s160 = sphi 0, %s162
    %s163 = sphi 0, %s160
    %s164 = sphi 0, %s163
    %s180 = sphi 0, %s164
    %s186 = sphi 0, %s188
    %s189 = sphi 0, %s186
    %s190 = sphi 0, %s189
    %s206 = sphi 0, %s190
  $region4: #{tpu_custom_call.1} parent=0 // loop_header_branch
    %17 = sbr.rel (%p15) target = $region8
  $region5: #{tpu_custom_call.1} parent=0 // loop_body
    %s19 = ssub.s32 %s14, 1
    %s20 = ssub.s32 %s14, 2
    %s21 = sadd.s32 %s14, 1
    %s22 = ssub.s32 %s14, %s21
    %p23 = scmp.eq.s32.totalorder %s22, 0
    %s25 = sadd.s32 %s24, 1
    %s26 = scalar_select %p23, %s24, %s25
    %p29 = pneg %p23
    %p30 = scmp.eq.s32.totalorder %s14, 1
    %p31 = por %p29, %p30
    %p32 = scmp.ne.s32.totalorder %s24, %s27
    %p33 = scmp.eq.s32.totalorder %s14, 0
    %p34 = por %p32, %p33
    %p35 = scmp.ne.s32.totalorder %s24, %s27
    %p36 = scmp.eq.s32.totalorder %s19, 1
    %p37 = por %p35, %p36
    %p38 = scmp.ne.s32.totalorder %s27, %s28
    %p39 = scmp.eq.s32.totalorder %s19, 0
    %p40 = por %p38, %p39
    %p41 = scmp.ne.s32.totalorder %s27, %s28
    %p42 = scmp.eq.s32.totalorder %s20, 1
    %p43 = por %p41, %p42
    %p45 = scmp.ne.s32.totalorder %s28, %s44
    %p46 = scmp.eq.s32.totalorder %s20, 0
    %p47 = por %p45, %p46
    %s49 = sadd.s32 %s48, 1
    %p52 = scmp.eq.s32.totalorder %s14, 1
    %p53 = scmp.ne.s32.totalorder %s48, %s50
    %p54 = scmp.eq.s32.totalorder %s14, 0
    %p55 = por %p53, %p54
    %p56 = scmp.ne.s32.totalorder %s48, %s50
    %p57 = scmp.eq.s32.totalorder %s19, 1
    %p58 = por %p56, %p57
    %p59 = scmp.ne.s32.totalorder %s50, %s51
    %p60 = scmp.eq.s32.totalorder %s19, 0
    %p61 = por %p59, %p60
    %p62 = scmp.ne.s32.totalorder %s50, %s51
    %p63 = scmp.eq.s32.totalorder %s20, 1
    %p64 = por %p62, %p63
    %p66 = scmp.ne.s32.totalorder %s51, %s65
    %p67 = scmp.eq.s32.totalorder %s20, 0
    %p68 = por %p66, %p67
    %s70 = sadd.s32 %s69, 1
    %p73 = scmp.eq.s32.totalorder %s14, 1
    %p74 = scmp.ne.s32.totalorder %s69, %s71
    %p75 = scmp.eq.s32.totalorder %s14, 0
    %p76 = por %p74, %p75
    %p77 = scmp.ne.s32.totalorder %s69, %s71
    %p78 = scmp.eq.s32.totalorder %s19, 1
    %p79 = por %p77, %p78
    %p80 = scmp.ne.s32.totalorder %s71, %s72
    %p81 = scmp.eq.s32.totalorder %s19, 0
    %p82 = por %p80, %p81
    %p83 = scmp.ne.s32.totalorder %s71, %s72
    %p84 = scmp.eq.s32.totalorder %s20, 1
    %p85 = por %p83, %p84
    %p87 = scmp.ne.s32.totalorder %s72, %s86
    %p88 = scmp.eq.s32.totalorder %s20, 0
    %p89 = por %p87, %p88
    %s91 = sadd.s32 %s90, 1
    %p94 = scmp.eq.s32.totalorder %s14, 1
    %p95 = scmp.ne.s32.totalorder %s90, %s92
    %p96 = scmp.eq.s32.totalorder %s14, 0
    %p97 = por %p95, %p96
    %p98 = scmp.ne.s32.totalorder %s90, %s92
    %p99 = scmp.eq.s32.totalorder %s19, 1
    %p100 = por %p98, %p99
    %p101 = scmp.ne.s32.totalorder %s92, %s93
    %p102 = scmp.eq.s32.totalorder %s19, 0
    %p103 = por %p101, %p102
    %p104 = scmp.ne.s32.totalorder %s92, %s93
    %p105 = scmp.eq.s32.totalorder %s20, 1
    %p106 = por %p104, %p105
    %p108 = scmp.ne.s32.totalorder %s93, %s107
    %p109 = scmp.eq.s32.totalorder %s20, 0
    %p110 = por %p108, %p109
    %s112 = sadd.s32 %s111, 1
    %p115 = scmp.eq.s32.totalorder %s14, 1
    %p116 = scmp.ne.s32.totalorder %s111, %s113
    %p117 = scmp.eq.s32.totalorder %s14, 0
    %p118 = por %p116, %p117
    %p119 = scmp.ne.s32.totalorder %s111, %s113
    %p120 = scmp.eq.s32.totalorder %s19, 1
    %p121 = por %p119, %p120
    %p122 = scmp.ne.s32.totalorder %s113, %s114
    %p123 = scmp.eq.s32.totalorder %s19, 0
    %p124 = por %p122, %p123
    %p125 = scmp.ne.s32.totalorder %s113, %s114
    %p126 = scmp.eq.s32.totalorder %s20, 1
    %p127 = por %p125, %p126
    %p129 = scmp.ne.s32.totalorder %s114, %s128
    %p130 = scmp.eq.s32.totalorder %s20, 0
    %p131 = por %p129, %p130
    %s132 = ssub.s32 %s14, %s21
    %p133 = scmp.eq.s32.totalorder %s132, 0
    %s135 = sadd.s32 %s134, 1
    %s136 = scalar_select %p133, %s134, %s135
    %p139 = pneg %p133
    %p140 = scmp.eq.s32.totalorder %s14, 1
    %p141 = por %p139, %p140
    %p142 = scmp.ne.s32.totalorder %s134, %s137
    %p143 = scmp.eq.s32.totalorder %s14, 0
    %p144 = por %p142, %p143
    %p145 = scmp.ne.s32.totalorder %s134, %s137
    %p146 = scmp.eq.s32.totalorder %s19, 1
    %p147 = por %p145, %p146
    %p148 = scmp.ne.s32.totalorder %s137, %s138
    %p149 = scmp.eq.s32.totalorder %s19, 0
    %p150 = por %p148, %p149
    %p151 = scmp.ne.s32.totalorder %s137, %s138
    %p152 = scmp.eq.s32.totalorder %s20, 1
    %p153 = por %p151, %p152
    %p155 = scmp.ne.s32.totalorder %s138, %s154
    %p156 = scmp.eq.s32.totalorder %s20, 0
    %p157 = por %p155, %p156
    %s158 = ssub.s32 %s14, %s21
    %p159 = scmp.eq.s32.totalorder %s158, 0
    %s161 = sadd.s32 %s160, 1
    %s162 = scalar_select %p159, %s160, %s161
    %p165 = pneg %p159
    %p166 = scmp.eq.s32.totalorder %s14, 1
    %p167 = por %p165, %p166
    %p168 = scmp.ne.s32.totalorder %s160, %s163
    %p169 = scmp.eq.s32.totalorder %s14, 0
    %p170 = por %p168, %p169
    %p171 = scmp.ne.s32.totalorder %s160, %s163
    %p172 = scmp.eq.s32.totalorder %s19, 1
    %p173 = por %p171, %p172
    %p174 = scmp.ne.s32.totalorder %s163, %s164
    %p175 = scmp.eq.s32.totalorder %s19, 0
    %p176 = por %p174, %p175
    %p177 = scmp.ne.s32.totalorder %s163, %s164
    %p178 = scmp.eq.s32.totalorder %s20, 1
    %p179 = por %p177, %p178
    %p181 = scmp.ne.s32.totalorder %s164, %s180
    %p182 = scmp.eq.s32.totalorder %s20, 0
    %p183 = por %p181, %p182
    %s184 = ssub.s32 %s14, %s21
    %p185 = scmp.eq.s32.totalorder %s184, 0
    %s187 = sadd.s32 %s186, 1
    %s188 = scalar_select %p185, %s186, %s187
    %p191 = pneg %p185
    %p192 = scmp.eq.s32.totalorder %s14, 1
    %p193 = por %p191, %p192
    %p194 = scmp.ne.s32.totalorder %s186, %s189
    %p195 = scmp.eq.s32.totalorder %s14, 0
    %p196 = por %p194, %p195
    %p197 = scmp.ne.s32.totalorder %s186, %s189
    %p198 = scmp.eq.s32.totalorder %s19, 1
    %p199 = por %p197, %p198
    %p200 = scmp.ne.s32.totalorder %s189, %s190
    %p201 = scmp.eq.s32.totalorder %s19, 0
    %p202 = por %p200, %p201
    %p203 = scmp.ne.s32.totalorder %s189, %s190
    %p204 = scmp.eq.s32.totalorder %s20, 1
    %p205 = por %p203, %p204
    %p207 = scmp.ne.s32.totalorder %s190, %s206
    %p208 = scmp.eq.s32.totalorder %s20, 0
    %p209 = por %p207, %p208
    %p210 = scmp.le.s32.totalorder 1, %s14
    %p211 = scmp.lt.s32.totalorder %s14, 3
    %p212 = pnand %p210, %p211
    %p213 = pneg %p212
    // Predicated region
    $region9: #{tpu_custom_call.1} parent=5 // pred_check
      _
    $region10: #{tpu_custom_call.1} parent=5 // pred_check_branch
      %215 = sbr.rel (%p212) target = $region12
    $region11: #{tpu_custom_call.1} parent=5 // pred_region
      %s216 = ssub.s32 %s14, 1
      // Predicated region
      $region13: #{tpu_custom_call.1} parent=11 // pred_check
        %p217 = pneg %p61
      $region14: #{tpu_custom_call.1} parent=11 // pred_check_branch
        %219 = sbr.rel (%p217) target = $region16
      $region15: #{tpu_custom_call.1} parent=11 // pred_region
        _
      $region16: #{tpu_custom_call.1} parent=11 // pred_fallthru
        _
      // Predicated region
      $region17: #{tpu_custom_call.1} parent=11 // pred_check
        %p220 = pneg %p82
      $region18: #{tpu_custom_call.1} parent=11 // pred_check_branch
        %222 = sbr.rel (%p220) target = $region20
      $region19: #{tpu_custom_call.1} parent=11 // pred_region
        _
      $region20: #{tpu_custom_call.1} parent=11 // pred_fallthru
        _
      // Predicated region
      $region21: #{tpu_custom_call.1} parent=11 // pred_check
        %p223 = pneg %p103
      $region22: #{tpu_custom_call.1} parent=11 // pred_check_branch
        %225 = sbr.rel (%p223) target = $region24
      $region23: #{tpu_custom_call.1} parent=11 // pred_region
        _
      $region24: #{tpu_custom_call.1} parent=11 // pred_fallthru
        _
      // Predicated region
      $region25: #{tpu_custom_call.1} parent=11 // pred_check
        %p226 = pneg %p124
      $region26: #{tpu_custom_call.1} parent=11 // pred_check_branch
        %228 = sbr.rel (%p226) target = $region28
      $region27: #{tpu_custom_call.1} parent=11 // pred_region
        _
      $region28: #{tpu_custom_call.1} parent=11 // pred_fallthru
        _
    $region12: #{tpu_custom_call.1} parent=5 // pred_fallthru
      _
    %p229 = scmp.lt.s32.totalorder %s14, 2
    // Predicated region
    $region29: #{tpu_custom_call.1} parent=5 // pred_check
      %p230 = pneg %p229
    $region30: #{tpu_custom_call.1} parent=5 // pred_check_branch
      %232 = sbr.rel (%p230) target = $region32
    $region31: #{tpu_custom_call.1} parent=5 // pred_region
      // Predicated region
      $region33: #{tpu_custom_call.1} parent=31 // pred_check
        %p233 = pneg %p34
      $region34: #{tpu_custom_call.1} parent=31 // pred_check_branch
        %235 = sbr.rel (%p233) target = $region36
      $region35: #{tpu_custom_call.1} parent=31 // pred_region
        %p236 = scmp.lt.s32.totalorder %s14, 1
        %s237 = scalar_select %p236, %s14, 1
        %s238 = smul.addr %s237, 8
        %s239 = smul.addr %s238, 8
        %s240 = scalar_lea.vmem %s0, %s239
      $region36: #{tpu_custom_call.1} parent=31 // pred_fallthru
        _
    $region32: #{tpu_custom_call.1} parent=5 // pred_fallthru
      _
    %p241 = scmp.le.s32.totalorder 1, %s14
    %p242 = scmp.lt.s32.totalorder %s14, 3
    %p243 = pnand %p241, %p242
    %p244 = pneg %p243
    // Predicated region
    $region37: #{tpu_custom_call.1} parent=5 // pred_check
      _
    $region38: #{tpu_custom_call.1} parent=5 // pred_check_branch
      %246 = sbr.rel (%p243) target = $region40
    $region39: #{tpu_custom_call.1} parent=5 // pred_region
      %s247 = ssub.s32 %s14, 1
      %p248 = scmp.lt.s32.totalorder %s19, 1
      %s249 = scalar_select %p248, %s19, 1
      %s250 = smul.addr %s249, 8
      %s251 = smul.addr %s250, 8
      %s252 = scalar_lea.vmem %s0, %s251
      %p253 = pneg %p40
      %p254 = pneg %p37
      %p255 = pneg %p61
      %p256 = pneg %p58
      %p257 = pneg %p82
      %p258 = pneg %p79
      %p259 = pneg %p103
      %p260 = pneg %p100
      %p261 = pneg %p124
      %p262 = pneg %p121
      %p263 = pneg %p150
      %p264 = pneg %p147
      %p265 = scmp.lt.s32.totalorder %s19, 1
      %s266 = scalar_select %p265, %s19, 1
      %s267 = smul.addr %s266, 4
      %s268 = scalar_lea.vmem %s5, %s267
      %p269 = pneg %p176
      %p270 = pneg %p173
      %p271 = scmp.lt.s32.totalorder %s19, 1
      %s272 = scalar_select %p271, %s19, 1
      %s273 = smul.addr %s272, 8
      %s274 = scalar_lea.vmem %s6, %s273
      %p275 = pneg %p202
      %p276 = pneg %p199
      %p277 = scmp.lt.s32.totalorder %s19, 1
      %s278 = scalar_select %p277, %s19, 1
      %s279 = smul.addr %s278, 2
      %s280 = smul.addr %s279, 8
      %s281 = scalar_lea.vmem %s7, %s280
      %p282 = scmp.lt.s32.totalorder %s19, 1
      %s283 = scalar_select %p282, %s19, 1
      %s284 = smul.addr %s283, 8
      %s285 = smul.addr %s284, 8
      %s286 = scalar_lea.vmem %s0, %s285
      %p287 = scmp.lt.s32.totalorder %s19, 1
      %s288 = scalar_select %p287, %s19, 1
      %s289 = smul.addr %s288, 4
      %s290 = scalar_lea.vmem %s5, %s289
      %p291 = scmp.lt.s32.totalorder %s19, 1
      %s292 = scalar_select %p291, %s19, 1
      %s293 = smul.addr %s292, 8
      %s294 = scalar_lea.vmem %s6, %s293
      %p295 = scmp.lt.s32.totalorder %s19, 1
      %s296 = scalar_select %p295, %s19, 1
      %s297 = smul.addr %s296, 2
      %s298 = smul.addr %s297, 8
      %s299 = scalar_lea.vmem %s7, %s298
      %v300 = vld [vmem:[%s286] sm:$0xff]
      %v301 = vld [vmem:[%s286 + $0x8] sm:$0xff]
      %v302 = vld [vmem:[%s286 + $0x10] sm:$0xff]
      %v303 = vld [vmem:[%s286 + $0x18] sm:$0xff]
      %v304 = vld [vmem:[%s286 + $0x20] sm:$0xff]
      %v305 = vld [vmem:[%s286 + $0x28] sm:$0xff]
      %v306 = vld [vmem:[%s286 + $0x30] sm:$0xf]
      %v307 = vld [vmem:[%s286 + $0x38] sm:$0xf]
      %v308 = vld [vmem:[%s1] sm:$0xff]
      %v309 = vld [vmem:[%s1 + $0x8] sm:$0xff]
      %v310 = vld [vmem:[%s1 + $0x10] sm:$0xff]
      %v311 = vld [vmem:[%s1 + $0x18] sm:$0xf]
      %313 = vset.pattern.permute.xlu0 0
      %314 = vperm.xlu0 %313, %v308
      %v315 = vpop.permute.xlu0 %314
      %318 = vset.pattern.permute.xlu0 0
      %319 = vperm.xlu0 %318, %v309
      %v320 = vpop.permute.xlu0 %319
      %323 = vset.pattern.permute.xlu0 0
      %324 = vperm.xlu0 %323, %v310
      %v325 = vpop.permute.xlu0 %324
      %328 = vset.pattern.permute.xlu0 0
      %329 = vperm.xlu0 %328, %v311
      %v330 = vpop.permute.xlu0 %329
      %v332 = vmul.f32 %v300, %v315
      %v333 = vmul.f32 %v301, %v315
      %v334 = vmul.f32 %v302, %v320
      %v335 = vmul.f32 %v303, %v320
      %v336 = vmul.f32 %v304, %v325
      %v337 = vmul.f32 %v305, %v325
      %v338 = vmul.f32 %v306, %v330
      %v339 = vmul.f32 %v307, %v330
      %v340 = vadd.f32 %v332, %v334
      %v341 = vadd.f32 %v340, %v336
      %vm342 = vcmask 1043456
      %v343 = vsel %vm342, %v338, 0.0
      %v344 = vadd.f32 %v341, %v343
      %v345 = vrot.slane %v344, 4
      %v346 = vadd.f32 %v344, %v345
      %v347 = vrot.slane %v346, 2
      %v348 = vadd.f32 %v346, %v347
      %v349 = vrot.slane %v348, 1
      %v350 = vadd.f32 %v348, %v349
      %vm351 = vcmask 556032
      %v352 = vsel %vm351, %v333, 0.0
      %v353 = vsel %vm351, %v335, 0.0
      %v354 = vadd.f32 %v352, %v353
      %v355 = vsel %vm351, %v337, 0.0
      %v356 = vadd.f32 %v354, %v355
      %vm357 = vcmask 551936
      %v358 = vsel %vm357, %v339, 0.0
      %v359 = vadd.f32 %v356, %v358
      %v360 = vrot.slane %v359, 4
      %v361 = vadd.f32 %v359, %v360
      %v362 = vrot.slane %v361, 2
      %v363 = vadd.f32 %v361, %v362
      %v364 = vrot.slane %v363, 1
      %v365 = vadd.f32 %v363, %v364
      %v366 = vsel %vm351, %v365, -inf
      %v367 = vmax.f32 %v350, %v366
      %368 = vmax.xlane.f32.xlu0 %v367
      %v369 = vpop.xlane.xlu0 %368
      %v370 = vsub.f32 %v350, %v369
      %v371 = vsub.f32 %v365, %v369
      %v372 = vmul.f32 %v370, 1.442695
      %v373 = vpow.pop %v372
      %v374 = vmul.f32 %v371, 1.442695
      %v375 = vpow.pop %v374
      %v376 = vsel %vm351, %v375, 0.0
      %v377 = vadd.f32 %v373, %v376
      %378 = vadd.xlane.f32.xlu0 %v377
      %v379 = vpop.xlane.xlu0 %378
      %v380 = vrcp.pop %v379
      %v381 = vmul.f32 %v373, %v380
      %v382 = vmul.f32 %v375, %v380
      %v383 = vmul.f32 %v300, %v381
      %v384 = vmul.f32 %v301, %v382
      %v385 = vmul.f32 %v302, %v381
      %v386 = vmul.f32 %v303, %v382
      %v387 = vmul.f32 %v304, %v381
      %v388 = vmul.f32 %v305, %v382
      %v389 = vmul.f32 %v306, %v381
      %v390 = vmul.f32 %v307, %v382
      %v391 = vsel %vm351, %v384, 0.0
      %v392 = vadd.f32 %v383, %v391
      %393 = vadd.xlane.f32.xlu0 %v392
      %v394 = vpop.xlane.xlu0 %393
      %v395 = vsel %vm351, %v386, 0.0
      %v396 = vadd.f32 %v385, %v395
      %397 = vadd.xlane.f32.xlu0 %v396
      %v398 = vpop.xlane.xlu0 %397
      %v399 = vsel %vm351, %v388, 0.0
      %v400 = vadd.f32 %v387, %v399
      %401 = vadd.xlane.f32.xlu0 %v400
      %v402 = vpop.xlane.xlu0 %401
      %v403 = vsel %vm342, %v389, 0.0
      %v404 = vsel %vm357, %v390, 0.0
      %v405 = vadd.f32 %v403, %v404
      %406 = vadd.xlane.f32.xlu0 %v405
      %v407 = vpop.xlane.xlu0 %406
      %v408 = vld [vmem:[%s2] sm:$0x7f]
      %vm409 = vcmask 228352
      %v411 = vsel %vm409, %v408, 0
      %v414 = vsel %vm342, %v407, 0
      %416 = vmatpush.msra.mxu0 0.0
      %417 = vmatpush.msra.mxu0 0.0
      %418 = vmatpush.msra.mxu0 0.0
      %419 = vmatpush.msra.mxu0 0.0
      %420 = vmatpush.msra.mxu0 0.0
      %421 = vmatpush.msra.mxu0 0.0
      %422 = vmatpush.msra.mxu0 0.0
      %423 = vmatpush.msra.mxu0 0.0
      %424 = vmatpush.msra.mxu0 0.0
      %425 = vmatpush.msra.mxu0 0.0
      %426 = vmatpush.msra.mxu0 0.0
      %427 = vmatpush.msra.mxu0 0.0
      %428 = vmatpush.msra.mxu0 %v414
      %429 = vmatpush.msra.mxu0 %v402
      %430 = vmatpush.msra.mxu0 %v398
      %431 = vmatpush.msra.mxu0 %v394
      %432 = vmatmul.f32.gmra.mxu0 %v411
      %v433 = vpop.f32.mrf.mxu0
      %v434 = vadd.f32 0.0, %v433
      %435 = vdwg.mxu0
      %v436 = vld [vmem:[%s3] sm:$0xff]
      %v437 = vld [vmem:[%s3 + $0x8] sm:$0xff]
      %v438 = vld [vmem:[%s3 + $0x10] sm:$0xff]
      %v439 = vld [vmem:[%s3 + $0x18] sm:$0xf]
      %v440 = vld [vmem:[%s4] sm:$0xff]
      %v441 = vld [vmem:[%s4 + $0x8] sm:$0xff]
      %v442 = vld [vmem:[%s4 + $0x10] sm:$0xff]
      %v443 = vld [vmem:[%s4 + $0x18] sm:$0xf]
      %vm444 = vcmask 56320
      %v446 = vsel %vm444, %v436, 0
      %v449 = vsel %vm444, %v437, 0
      %v452 = vsel %vm444, %v438, 0
      %v455 = vsel %vm444, %v439, 0
      %vm457 = vcmask 1046528
      %v459 = vsel %vm457, %v434, 0
      %461 = vmatpush.msra.mxu0 0.0
      %462 = vmatpush.msra.mxu0 0.0
      %463 = vmatpush.msra.mxu0 0.0
      %464 = vmatpush.msra.mxu0 0.0
      %465 = vmatpush.msra.mxu0 0.0
      %466 = vmatpush.msra.mxu0 0.0
      %467 = vmatpush.msra.mxu0 0.0
      %468 = vmatpush.msra.mxu0 0.0
      %469 = vmatpush.msra.mxu0 0.0
      %470 = vmatpush.msra.mxu0 0.0
      %471 = vmatpush.msra.mxu0 0.0
      %472 = vmatpush.msra.mxu0 0.0
      %473 = vmatpush.msra.mxu0 0.0
      %474 = vmatpush.msra.mxu0 0.0
      %475 = vmatpush.msra.mxu0 0.0
      %476 = vmatpush.msra.mxu0 %v459
      %477 = vmatmul.f32.gmra.mxu0 %v446
      %v478 = vpop.f32.mrf.mxu0
      %v479 = vadd.f32 %v440, %v478
      %480 = vmatmul.f32.gmra.mxu0 %v449
      %v481 = vpop.f32.mrf.mxu0
      %v482 = vadd.f32 %v441, %v481
      %483 = vmatmul.f32.gmra.mxu0 %v452
      %v484 = vpop.f32.mrf.mxu0
      %v485 = vadd.f32 %v442, %v484
      %486 = vmatmul.f32.gmra.mxu0 %v455
      %v487 = vpop.f32.mrf.mxu0
      %v488 = vadd.f32 %v443, %v487
      %489 = vdwg.mxu0
      %v490 = vxor.u32 %v479, 2147483648
      %v491 = vxor.u32 %v482, 2147483648
      %v492 = vxor.u32 %v485, 2147483648
      %v493 = vxor.u32 %v488, 2147483648
      %v494 = vmul.f32 %v490, 1.442695
      %v495 = vpow.pop %v494
      %v496 = vmul.f32 %v491, 1.442695
      %v497 = vpow.pop %v496
      %v498 = vmul.f32 %v492, 1.442695
      %v499 = vpow.pop %v498
      %v500 = vmul.f32 %v493, 1.442695
      %v501 = vpow.pop %v500
      %v502 = vadd.f32 %v495, 1.0
      %v503 = vadd.f32 %v497, 1.0
      %v504 = vadd.f32 %v499, 1.0
      %v505 = vadd.f32 %v501, 1.0
      %v506 = vrcp.pop %v502
      %v507 = vmul.f32 %v502, %v506
      %v508 = vsub.f32 1.0, %v507
      %v509 = vmul.f32 %v506, %v508
      %v510 = vadd.f32 %v506, %v509
      %vm511 = vweird.f32 %v502
      %vm512 = vweird.f32 %v506
      %vm513 = vmor %vm511, %vm512
      %v514 = vsel %vm513, %v506, %v510
      %v515 = vand.u32 2147483647, %v502
      %vm516 = vcmp.eq.f32.partialorder %v515, 8.507059e+37
      %v517 = vand.u32 %v502, 2147483648
      %v518 = vor.u32 1.1754944e-38, %v517
      %v519 = vsel %vm516, %v518, %v514
      %v520 = vmul.f32 1.0, %v519
      %v521 = vrcp.pop %v503
      %v522 = vmul.f32 %v503, %v521
      %v523 = vsub.f32 1.0, %v522
      %v524 = vmul.f32 %v521, %v523
      %v525 = vadd.f32 %v521, %v524
      %vm526 = vweird.f32 %v503
      %vm527 = vweird.f32 %v521
      %vm528 = vmor %vm526, %vm527
      %v529 = vsel %vm528, %v521, %v525
      %v530 = vand.u32 2147483647, %v503
      %vm531 = vcmp.eq.f32.partialorder %v530, 8.507059e+37
      %v532 = vand.u32 %v503, 2147483648
      %v533 = vor.u32 1.1754944e-38, %v532
      %v534 = vsel %vm531, %v533, %v529
      %v535 = vmul.f32 1.0, %v534
      %v536 = vrcp.pop %v504
      %v537 = vmul.f32 %v504, %v536
      %v538 = vsub.f32 1.0, %v537
      %v539 = vmul.f32 %v536, %v538
      %v540 = vadd.f32 %v536, %v539
      %vm541 = vweird.f32 %v504
      %vm542 = vweird.f32 %v536
      %vm543 = vmor %vm541, %vm542
      %v544 = vsel %vm543, %v536, %v540
      %v545 = vand.u32 2147483647, %v504
      %vm546 = vcmp.eq.f32.partialorder %v545, 8.507059e+37
      %v547 = vand.u32 %v504, 2147483648
      %v548 = vor.u32 1.1754944e-38, %v547
      %v549 = vsel %vm546, %v548, %v544
      %v550 = vmul.f32 1.0, %v549
      %v551 = vrcp.pop %v505
      %v552 = vmul.f32 %v505, %v551
      %v553 = vsub.f32 1.0, %v552
      %v554 = vmul.f32 %v551, %v553
      %v555 = vadd.f32 %v551, %v554
      %vm556 = vweird.f32 %v505
      %vm557 = vweird.f32 %v551
      %vm558 = vmor %vm556, %vm557
      %v559 = vsel %vm558, %v551, %v555
      %v560 = vand.u32 2147483647, %v505
      %vm561 = vcmp.eq.f32.partialorder %v560, 8.507059e+37
      %v562 = vand.u32 %v505, 2147483648
      %v563 = vor.u32 1.1754944e-38, %v562
      %v564 = vsel %vm561, %v563, %v559
      %v565 = vmul.f32 1.0, %v564
      %vm566 = vcmask 3072
      %567 = vst.msk [vmem:[%s290] sm:$0xf] %vm566, %v520
      %vm568 = vcmask 7172
      %569 = vst.msk [vmem:[%s294 - $0x4] sm:$0xf0] %vm568, %v520
      %570 = vst.msk [vmem:[%s294 + $0x4] sm:$0xf] %vm566, %v535
      %571 = vst.msk [vmem:[%s299 - $0x4] sm:$0xf0] %vm568, %v535
      %vm572 = vcmask 7168
      %573 = vst.msk [vmem:[%s299 + $0x4] sm:$0xff] %vm572, %v550
      %574 = vst.msk [vmem:[%s299 + $0xc] sm:$0xf] %vm566, %v565
      %p575 = scmp.lt.s32.totalorder %s19, 1
      %s576 = scalar_select %p575, %s19, 1
      %s577 = smul.addr %s576, 4
      %s578 = scalar_lea.vmem %s5, %s577
      %p579 = scmp.lt.s32.totalorder %s19, 1
      %s580 = scalar_select %p579, %s19, 1
      %s581 = smul.addr %s580, 8
      %s582 = scalar_lea.vmem %s6, %s581
      %p583 = scmp.lt.s32.totalorder %s19, 1
      %s584 = scalar_select %p583, %s19, 1
      %s585 = smul.addr %s584, 2
      %s586 = smul.addr %s585, 8
      %s587 = scalar_lea.vmem %s7, %s586
      // Predicated region
      $region41: #{tpu_custom_call.1} parent=39 // pred_check
        %p588 = pneg %p147
      $region42: #{tpu_custom_call.1} parent=39 // pred_check_branch
        %590 = sbr.rel (%p588) target = $region44
      $region43: #{tpu_custom_call.1} parent=39 // pred_region
        _
      $region44: #{tpu_custom_call.1} parent=39 // pred_fallthru
        _
      // Predicated region
      $region45: #{tpu_custom_call.1} parent=39 // pred_check
        %p591 = pneg %p173
      $region46: #{tpu_custom_call.1} parent=39 // pred_check_branch
        %593 = sbr.rel (%p591) target = $region48
      $region47: #{tpu_custom_call.1} parent=39 // pred_region
        _
      $region48: #{tpu_custom_call.1} parent=39 // pred_fallthru
        _
      // Predicated region
      $region49: #{tpu_custom_call.1} parent=39 // pred_check
        %p594 = pneg %p199
      $region50: #{tpu_custom_call.1} parent=39 // pred_check_branch
        %596 = sbr.rel (%p594) target = $region52
      $region51: #{tpu_custom_call.1} parent=39 // pred_region
        _
      $region52: #{tpu_custom_call.1} parent=39 // pred_fallthru
        _
    $region40: #{tpu_custom_call.1} parent=5 // pred_fallthru
      _
    %p597 = scmp.le.s32.totalorder 2, %s14
    // Predicated region
    $region53: #{tpu_custom_call.1} parent=5 // pred_check
      %p598 = pneg %p597
    $region54: #{tpu_custom_call.1} parent=5 // pred_check_branch
      %600 = sbr.rel (%p598) target = $region56
    $region55: #{tpu_custom_call.1} parent=5 // pred_region
      %s601 = ssub.s32 %s14, 2
      // Predicated region
      $region57: #{tpu_custom_call.1} parent=55 // pred_check
        %p602 = pneg %p153
      $region58: #{tpu_custom_call.1} parent=55 // pred_check_branch
        %604 = sbr.rel (%p602) target = $region60
      $region59: #{tpu_custom_call.1} parent=55 // pred_region
        %p605 = scmp.lt.s32.totalorder %s20, 1
        %s606 = scalar_select %p605, %s20, 1
        %s607 = smul.addr %s606, 4
        %s608 = scalar_lea.vmem %s5, %s607
      $region60: #{tpu_custom_call.1} parent=55 // pred_fallthru
        _
      // Predicated region
      $region61: #{tpu_custom_call.1} parent=55 // pred_check
        %p609 = pneg %p179
      $region62: #{tpu_custom_call.1} parent=55 // pred_check_branch
        %611 = sbr.rel (%p609) target = $region64
      $region63: #{tpu_custom_call.1} parent=55 // pred_region
        %p612 = scmp.lt.s32.totalorder %s20, 1
        %s613 = scalar_select %p612, %s20, 1
        %s614 = smul.addr %s613, 8
        %s615 = scalar_lea.vmem %s6, %s614
      $region64: #{tpu_custom_call.1} parent=55 // pred_fallthru
        _
      // Predicated region
      $region65: #{tpu_custom_call.1} parent=55 // pred_check
        %p616 = pneg %p205
      $region66: #{tpu_custom_call.1} parent=55 // pred_check_branch
        %618 = sbr.rel (%p616) target = $region68
      $region67: #{tpu_custom_call.1} parent=55 // pred_region
        %p619 = scmp.lt.s32.totalorder %s20, 1
        %s620 = scalar_select %p619, %s20, 1
        %s621 = smul.addr %s620, 2
        %s622 = smul.addr %s621, 8
        %s623 = scalar_lea.vmem %s7, %s622
      $region68: #{tpu_custom_call.1} parent=55 // pred_fallthru
        _
    $region56: #{tpu_custom_call.1} parent=5 // pred_fallthru
      _
  $region6: #{tpu_custom_call.1} parent=0 // loop_footer
    %s18 = sadd.s32 1, %s14
  $region7: #{tpu_custom_call.1} parent=0 // loop_footer_branch
    %13 = sbr.rel target = $region3
  $region8: #{tpu_custom_call.1} parent=0 // loop_exit
    _

</llo_original>
